<compile_context>
chip_gen: v6e
topology: v6e:2x2x1
jax: 0.10.0
libtpu: 0.0.40
codegen_flags: <defaults>
</compile_context>

<pallas_src>
import math

import jax
import jax.numpy as jnp
from jax.experimental import pallas as pl
from jax.experimental.pallas import tpu as pltpu


def _gate_kernel(scal_ref, h1_ref, h2_ref, deg_ref, w1_ref, w2_ref, out_ref):
    # out[r, j] = sigmoid( dot(h1_row, v1) + dot(h2_row, v2) + deg*w3c + c )
    # where packed row r, lane-group j correspond to original row 8*r + j.
    s = jnp.dot(h1_ref[...], w1_ref[...], preferred_element_type=jnp.float32)
    s = s + jnp.dot(h2_ref[...], w2_ref[...], preferred_element_type=jnp.float32)
    s = s + deg_ref[...] * scal_ref[0] + scal_ref[1]
    out_ref[...] = jax.nn.sigmoid(s)


def mlp_forward(h1, h2, deg, params, *, block_rows=1024):
    """block_rows counts *packed* rows (8 original batch rows each) per grid step."""
    n, in_ch = h1.shape

    # ---- eval-mode algebraic fold (dropout == identity) ----
    v1 = params["w1"] @ params["w3a"]                          # [in, 1]
    v2 = params["w2"] @ params["w3b"]                          # [in, 1]
    c = (params["b1"] @ params["w3a"] + params["b2"] @ params["w3b"]
         + params["b3"]).reshape(())
    w3c = params["w3c"].reshape(())
    scal = jnp.stack([w3c, c]).astype(jnp.float32)             # (2,) -> SMEM

    # ---- pack 8 rows per (8*in)-lane row: contiguous reshape, no data copy ----
    pad = (-n) % 8
    if pad:
        h1 = jnp.pad(h1, ((0, pad), (0, 0)))
        h2 = jnp.pad(h2, ((0, pad), (0, 0)))
        deg = jnp.pad(deg, ((0, pad), (0, 0)))
    n_pad = n + pad
    rows = n_pad // 8
    lanes = 8 * in_ch                                          # 128 for in=16
    h1p = h1.reshape(rows, lanes)
    h2p = h2.reshape(rows, lanes)
    degp = deg.reshape(rows, 8)
    eye8 = jnp.eye(8, dtype=jnp.float32)
    w1p = jnp.kron(eye8, v1.astype(jnp.float32))               # [8*in, 8]
    w2p = jnp.kron(eye8, v2.astype(jnp.float32))               # [8*in, 8]

    tm = rows if rows <= block_rows else block_rows            # full or mult-of-8
    grid = (pl.cdiv(rows, tm),)

    cost = pl.CostEstimate(
        flops=int(n * (4 * in_ch + 3)),
        transcendentals=int(n),
        bytes_accessed=int(n * (2 * in_ch + 2) * 4),
    )

    outp = pl.pallas_call(
        _gate_kernel,
        out_shape=jax.ShapeDtypeStruct((rows, 8), jnp.float32),
        grid=grid,
        in_specs=[
            pl.BlockSpec(memory_space=pltpu.MemorySpace.SMEM),    # [w3c, c] scalars
            pl.BlockSpec((tm, lanes), lambda i: (i, 0)),          # h1 packed
            pl.BlockSpec((tm, lanes), lambda i: (i, 0)),          # h2 packed
            pl.BlockSpec((tm, 8), lambda i: (i, 0)),              # deg packed
            pl.BlockSpec((lanes, 8), lambda i: (0, 0)),           # kron(I8, v1), resident
            pl.BlockSpec((lanes, 8), lambda i: (0, 0)),           # kron(I8, v2), resident
        ],
        out_specs=pl.BlockSpec((tm, 8), lambda i: (i, 0)),
        compiler_params=pltpu.CompilerParams(
            dimension_semantics=("parallel",),
            vmem_limit_bytes=32 * 1024 * 1024,
        ),
        cost_estimate=cost,
    )(scal, h1p, h2p, degp, w1p, w2p)

    return outp.reshape(n_pad, 1)[:n]


def xavier_normal(key, shape, gain):
    # torch shape convention: (fan_out, fan_in)
    fan_out, fan_in = shape
    std = gain * math.sqrt(2.0 / (fan_in + fan_out))
    return std * jax.random.normal(key, shape, dtype=jnp.float32)


def linear_bias(key, fan_in, fan_out):
    bound = 1.0 / math.sqrt(fan_in)
    return jax.random.uniform(key, (fan_out,), jnp.float32, -bound, bound)


def init_params(key, in_channels, gate_channels):
    gain = 1.414
    k = jax.random.split(key, 6)
    # torch-layout weights: [out, in]
    g1_w = xavier_normal(k[0], (gate_channels, in_channels), gain)
    g2_w = xavier_normal(k[1], (gate_channels, in_channels), gain)
    g3_w = xavier_normal(k[2], (1, 2 * gate_channels + 1), gain)
    g1_b = linear_bias(k[3], in_channels, gate_channels)
    g2_b = linear_bias(k[4], in_channels, gate_channels)
    g3_b = linear_bias(k[5], 2 * gate_channels + 1, 1)
    G = gate_channels
    return {
        "w1": g1_w.T,                              # [in, G]
        "b1": g1_b.reshape(1, G),                  # [1, G]
        "w2": g2_w.T,                              # [in, G]
        "b2": g2_b.reshape(1, G),                  # [1, G]
        "w3a": g3_w[:, :G].T,                      # [G, 1]
        "w3b": g3_w[:, G:2 * G].T,                 # [G, 1]
        "w3c": g3_w[:, 2 * G:].reshape(1, 1),      # [1, 1]
        "b3": g3_b.reshape(1, 1),                  # [1, 1]
    }


def reference_forward(h1, h2, deg, params):
    z1 = h1 @ params["w1"] + params["b1"]
    z2 = h2 @ params["w2"] + params["b2"]
    s = z1 @ params["w3a"] + z2 @ params["w3b"] + deg * params["w3c"] + params["b3"]
    return jax.nn.sigmoid(s)


if __name__ == "__main__":
    N, IN_CH, GATE_CH = 8, 16, 32

    key = jax.random.PRNGKey(0)
    k_h1, k_h2, k_deg, k_params = jax.random.split(key, 4)

    h1 = jax.random.normal(k_h1, (N, IN_CH), dtype=jnp.float32)
    h2 = jax.random.normal(k_h2, (N, IN_CH), dtype=jnp.float32)
    deg = jax.random.uniform(k_deg, (N, 1), dtype=jnp.float32, minval=0.0, maxval=8.0)

    params = init_params(k_params, IN_CH, GATE_CH)

    out = jax.block_until_ready(mlp_forward(h1, h2, deg, params))
    ref = reference_forward(h1, h2, deg, params)
    assert out.shape == (N, 1)
    assert jnp.allclose(out, ref, atol=2e-5, rtol=2e-5), "mismatch vs reference"

    # Exercise the multi-step pipelined grid + ragged batch (partial last block).
    N2 = 1003
    k1, k2, k3 = jax.random.split(jax.random.PRNGKey(1), 3)
    h1b = jax.random.normal(k1, (N2, IN_CH), dtype=jnp.float32)
    h2b = jax.random.normal(k2, (N2, IN_CH), dtype=jnp.float32)
    degb = jax.random.uniform(k3, (N2, 1), dtype=jnp.float32, minval=0.0, maxval=8.0)
    out2 = jax.block_until_ready(mlp_forward(h1b, h2b, degb, params, block_rows=32))
    ref2 = reference_forward(h1b, h2b, degb, params)
    assert out2.shape == (N2, 1)
    assert jnp.allclose(out2, ref2, atol=2e-5, rtol=2e-5), "mismatch vs reference (tiled)"

    print("KERNEL_OK")
</pallas_src>

<mosaic_0001>
module attributes {stable_mosaic.version = 11 : i64} {
  func.func @_gate_kernel(%arg0: i32, %arg1: memref<2xf32, #tpu.memory_space<smem>>, %arg2: memref<1x128xf32, #tpu.memory_space<vmem>>, %arg3: memref<1x128xf32, #tpu.memory_space<vmem>>, %arg4: memref<1x8xf32, #tpu.memory_space<vmem>>, %arg5: memref<128x8xf32, #tpu.memory_space<vmem>>, %arg6: memref<128x8xf32, #tpu.memory_space<vmem>>, %arg7: memref<1x8xf32, #tpu.memory_space<vmem>>) attributes {dimension_semantics = [#tpu.dimension_semantics<parallel>], iteration_bounds = array<i64: 1>, scalar_prefetch = 0 : i64, scratch_operands = 0 : i64, tpu.core_type = #tpu.core_type<tc>, window_params = [{transform_indices = @transform_0, window_bounds = array<i64: 2>}, {transform_indices = @transform_1, window_bounds = array<i64: 1, 128>}, {transform_indices = @transform_2, window_bounds = array<i64: 1, 128>}, {transform_indices = @transform_3, window_bounds = array<i64: 1, 8>}, {pipeline_mode = #tpu.pipeline_mode<synchronous>, transform_indices = @transform_4, window_bounds = array<i64: 128, 8>}, {pipeline_mode = #tpu.pipeline_mode<synchronous>, transform_indices = @transform_5, window_bounds = array<i64: 128, 8>}, {transform_indices = @transform_6, window_bounds = array<i64: 1, 8>}]} {
    %c0 = arith.constant 0 : index
    %c0_0 = arith.constant 0 : index
    %0 = vector.load %arg2[%c0, %c0_0] : memref<1x128xf32, #tpu.memory_space<vmem>>, vector<1x128xf32>
    %c0_1 = arith.constant 0 : index
    %c0_2 = arith.constant 0 : index
    %1 = vector.load %arg5[%c0_1, %c0_2] : memref<128x8xf32, #tpu.memory_space<vmem>>, vector<128x8xf32>
    %cst = arith.constant dense<0.000000e+00> : vector<1x8xf32>
    %2 = tpu.matmul %0, %1, %cst {dimension_numbers = #tpu.dot_dimension_numbers<[1], [0], [0], [1], [0, 0, 1, 1], [], []>} : vector<1x128xf32>, vector<128x8xf32>, vector<1x8xf32> -> vector<1x8xf32>
    %c0_3 = arith.constant 0 : index
    %c0_4 = arith.constant 0 : index
    %3 = vector.load %arg3[%c0_3, %c0_4] : memref<1x128xf32, #tpu.memory_space<vmem>>, vector<1x128xf32>
    %c0_5 = arith.constant 0 : index
    %c0_6 = arith.constant 0 : index
    %4 = vector.load %arg6[%c0_5, %c0_6] : memref<128x8xf32, #tpu.memory_space<vmem>>, vector<128x8xf32>
    %cst_7 = arith.constant dense<0.000000e+00> : vector<1x8xf32>
    %5 = tpu.matmul %3, %4, %cst_7 {dimension_numbers = #tpu.dot_dimension_numbers<[1], [0], [0], [1], [0, 0, 1, 1], [], []>} : vector<1x128xf32>, vector<128x8xf32>, vector<1x8xf32> -> vector<1x8xf32>
    %6 = arith.addf %2, %5 : vector<1x8xf32>
    %c0_8 = arith.constant 0 : index
    %c0_9 = arith.constant 0 : index
    %7 = vector.load %arg4[%c0_8, %c0_9] : memref<1x8xf32, #tpu.memory_space<vmem>>, vector<1x8xf32>
    %c0_10 = arith.constant 0 : index
    %8 = memref.load %arg1[%c0_10] : memref<2xf32, #tpu.memory_space<smem>>
    %9 = vector.broadcast %8 : f32 to vector<1x8xf32>
    %10 = arith.mulf %7, %9 : vector<1x8xf32>
    %11 = arith.addf %6, %10 : vector<1x8xf32>
    %c1 = arith.constant 1 : index
    %12 = memref.load %arg1[%c1] : memref<2xf32, #tpu.memory_space<smem>>
    %13 = vector.broadcast %12 : f32 to vector<1x8xf32>
    %14 = arith.addf %11, %13 : vector<1x8xf32>
    %15 = arith.negf %14 : vector<1x8xf32>
    %16 = math.exp %15 : vector<1x8xf32>
    %cst_11 = arith.constant 1.000000e+00 : f32
    %17 = vector.broadcast %cst_11 : f32 to vector<1x8xf32>
    %18 = arith.addf %17, %16 : vector<1x8xf32>
    %19 = arith.divf %17, %18 : vector<1x8xf32>
    %c0_12 = arith.constant 0 : index
    %c0_13 = arith.constant 0 : index
    %20 = vector.load %arg7[%c0_12, %c0_13] : memref<1x8xf32, #tpu.memory_space<vmem>>, vector<1x8xf32>
    tpu.vector_store %arg7[%c0_12, %c0_13], %19 {strides = array<i32>} : memref<1x8xf32, #tpu.memory_space<vmem>>, vector<1x8xf32>,
    return
  }
  func.func @transform_0(%arg0: i32) -> i32 {
    %c0_i32 = arith.constant 0 : i32
    %c0_i32_0 = arith.constant 0 : i32
    return %c0_i32 : i32
  }
  func.func @transform_1(%arg0: i32) -> (i32, i32) {
    %c0_i32 = arith.constant 0 : i32
    %c0_i32_0 = arith.constant 0 : i32
    return %arg0, %c0_i32 : i32, i32
  }
  func.func @transform_2(%arg0: i32) -> (i32, i32) {
    %c0_i32 = arith.constant 0 : i32
    %c0_i32_0 = arith.constant 0 : i32
    return %arg0, %c0_i32 : i32, i32
  }
  func.func @transform_3(%arg0: i32) -> (i32, i32) {
    %c0_i32 = arith.constant 0 : i32
    %c0_i32_0 = arith.constant 0 : i32
    return %arg0, %c0_i32 : i32, i32
  }
  func.func @transform_4(%arg0: i32) -> (i32, i32) {
    %c0_i32 = arith.constant 0 : i32
    %c0_i32_0 = arith.constant 0 : i32
    %c0_i32_1 = arith.constant 0 : i32
    return %c0_i32, %c0_i32_0 : i32, i32
  }
  func.func @transform_5(%arg0: i32) -> (i32, i32) {
    %c0_i32 = arith.constant 0 : i32
    %c0_i32_0 = arith.constant 0 : i32
    %c0_i32_1 = arith.constant 0 : i32
    return %c0_i32, %c0_i32_0 : i32, i32
  }
  func.func @transform_6(%arg0: i32) -> (i32, i32) {
    %c0_i32 = arith.constant 0 : i32
    %c0_i32_0 = arith.constant 0 : i32
    return %arg0, %c0_i32 : i32, i32
  }
}

</mosaic_0001>

<llo_original>
// kernel: tpu_custom_call.1
$region0: #{tpu_custom_call.1}
  #allocation0 [shape = 'u32[]', space=smem, size = 0x4, offset = 0x4, fixed_abs, tag = 'smem constant byte address 0x4 - core index']
  #allocation1 [shape = 'u32[144,128]{1,0:T(1,128)}', space=vmem, size = 0x12000, scoped, tag = 'internal scratch']
  %s0 = inlined_call_operand.vmem [shape: f32[2], index: 0, kind: input, shape index: {}]
  %s1 = inlined_call_operand.vmem [shape: f32[1,128], index: 1, kind: input, shape index: {}]
  %s2 = inlined_call_operand.vmem [shape: f32[1,128], index: 2, kind: input, shape index: {}]
  %s3 = inlined_call_operand.vmem [shape: f32[1,8], index: 3, kind: input, shape index: {}]
  %s4 = inlined_call_operand.vmem [shape: f32[128,8], index: 4, kind: input, shape index: {}]
  %s5 = inlined_call_operand.vmem [shape: f32[128,8], index: 5, kind: input, shape index: {}]
  %s6 = inlined_call_operand.hbm [shape: f32[1,8], index: 6, kind: output, shape index: {}]
  %s7 = sld [smem:[#allocation0]]
  $region38: #{tpu_custom_call.1} parent=0
    _
  %s9 = ssub.s32 1, %s7
  %s10 = scalar_select 0, %s9, %s7
  $region1: #{tpu_custom_call.1} parent=0
    #allocation2 [shape = 'u8[512]{0}', space=smem, size = 0x200, scoped, tag = 'input window, operand 0, single buffered']
    #allocation3 [shape = 's32[1]{0}', space=sflag, size = 0x4, scoped, tag = 'scoped memory for tpu_custom_call.1']
    #allocation4 [shape = 's32[1]{0}', space=sflag, size = 0x4, scoped, tag = 'scoped memory for tpu_custom_call.1']
    #allocation5 [shape = 'u8[512]{0}', space=vmem, size = 0x400, scoped, tag = 'output window, operand 0, single buffered']
    %11 = vsyncpa [#allocation4], 0
    %12 = vsyncpa [#allocation3], 0
    // Predicated region
    $region2: #{tpu_custom_call.1} parent=1 // pred_check
      _
    $region3: #{tpu_custom_call.1} parent=1 // pred_check_branch
      %14 = sbr.rel (0) target = $region5
    $region4: #{tpu_custom_call.1} parent=1 // pred_region
      %s16 = ssub.s32 16, 16
      %17 = vsyncadd [#allocation4], %s16
      %s19 = sshll.u32 %s0, 4
      %s20 = int_to_ptr.vmem [resolvable:$true] %s19
      %22 = dma.vmem_to_smem %s20, 16, [#allocation2], [#allocation4]
    $region5: #{tpu_custom_call.1} parent=1 // pred_fallthru
      _
    // Predicated region
    $region6: #{tpu_custom_call.1} parent=1 // pred_check
      _
    $region7: #{tpu_custom_call.1} parent=1 // pred_check_branch
      %24 = sbr.rel (0) target = $region9
    $region8: #{tpu_custom_call.1} parent=1 // pred_region
      _
    $region9: #{tpu_custom_call.1} parent=1 // pred_fallthru
      _
    // Predicated region
    $region10: #{tpu_custom_call.1} parent=1 // pred_check
      _
    $region11: #{tpu_custom_call.1} parent=1 // pred_check_branch
      %26 = sbr.rel (0) target = $region13
    $region12: #{tpu_custom_call.1} parent=1 // pred_region
      _
    $region13: #{tpu_custom_call.1} parent=1 // pred_fallthru
      _
    // Predicated region
    $region14: #{tpu_custom_call.1} parent=1 // pred_check
      _
    $region15: #{tpu_custom_call.1} parent=1 // pred_check_branch
      %28 = sbr.rel (0) target = $region17
    $region16: #{tpu_custom_call.1} parent=1 // pred_region
      _
    $region17: #{tpu_custom_call.1} parent=1 // pred_fallthru
      _
    // Predicated region
    $region18: #{tpu_custom_call.1} parent=1 // pred_check
      _
    $region19: #{tpu_custom_call.1} parent=1 // pred_check_branch
      %30 = sbr.rel (0) target = $region21
    $region20: #{tpu_custom_call.1} parent=1 // pred_region
      _
    $region21: #{tpu_custom_call.1} parent=1 // pred_fallthru
      _
    // Predicated region
    $region22: #{tpu_custom_call.1} parent=1 // pred_check
      _
    $region23: #{tpu_custom_call.1} parent=1 // pred_check_branch
      %32 = sbr.rel (0) target = $region25
    $region24: #{tpu_custom_call.1} parent=1 // pred_region
      _
    $region25: #{tpu_custom_call.1} parent=1 // pred_fallthru
      _
    // Predicated region
    $region26: #{tpu_custom_call.1} parent=1 // pred_check
      _
    $region27: #{tpu_custom_call.1} parent=1 // pred_check_branch
      %34 = sbr.rel (0) target = $region29
    $region28: #{tpu_custom_call.1} parent=1 // pred_region
      %35 = dma.done [#allocation4], 16
    $region29: #{tpu_custom_call.1} parent=1 // pred_fallthru
      _
    %36 = sfence
    %v37 = vld [vmem:[%s1] sm:$0x1]
    %v38 = vld [vmem:[%s4] sm:$0xff]
    %v39 = vld [vmem:[%s4 + $0x8] sm:$0xff]
    %v40 = vld [vmem:[%s4 + $0x10] sm:$0xff]
    %v41 = vld [vmem:[%s4 + $0x18] sm:$0xff]
    %v42 = vld [vmem:[%s4 + $0x20] sm:$0xff]
    %v43 = vld [vmem:[%s4 + $0x28] sm:$0xff]
    %v44 = vld [vmem:[%s4 + $0x30] sm:$0xff]
    %v45 = vld [vmem:[%s4 + $0x38] sm:$0xff]
    %v46 = vld [vmem:[%s4 + $0x40] sm:$0xff]
    %v47 = vld [vmem:[%s4 + $0x48] sm:$0xff]
    %v48 = vld [vmem:[%s4 + $0x50] sm:$0xff]
    %v49 = vld [vmem:[%s4 + $0x58] sm:$0xff]
    %v50 = vld [vmem:[%s4 + $0x60] sm:$0xff]
    %v51 = vld [vmem:[%s4 + $0x68] sm:$0xff]
    %v52 = vld [vmem:[%s4 + $0x70] sm:$0xff]
    %v53 = vld [vmem:[%s4 + $0x78] sm:$0xff]
    %v54 = vld [vmem:[%s2] sm:$0x1]
    %v55 = vld [vmem:[%s5] sm:$0xff]
    %v56 = vld [vmem:[%s5 + $0x8] sm:$0xff]
    %v57 = vld [vmem:[%s5 + $0x10] sm:$0xff]
    %v58 = vld [vmem:[%s5 + $0x18] sm:$0xff]
    %v59 = vld [vmem:[%s5 + $0x20] sm:$0xff]
    %v60 = vld [vmem:[%s5 + $0x28] sm:$0xff]
    %v61 = vld [vmem:[%s5 + $0x30] sm:$0xff]
    %v62 = vld [vmem:[%s5 + $0x38] sm:$0xff]
    %v63 = vld [vmem:[%s5 + $0x40] sm:$0xff]
    %v64 = vld [vmem:[%s5 + $0x48] sm:$0xff]
    %v65 = vld [vmem:[%s5 + $0x50] sm:$0xff]
    %v66 = vld [vmem:[%s5 + $0x58] sm:$0xff]
    %v67 = vld [vmem:[%s5 + $0x60] sm:$0xff]
    %v68 = vld [vmem:[%s5 + $0x68] sm:$0xff]
    %v69 = vld [vmem:[%s5 + $0x70] sm:$0xff]
    %v70 = vld [vmem:[%s5 + $0x78] sm:$0xff]
    %71 = vmatprep.subr.mxu0 0.0
    %72 = vmatpush1.msra.mxu0 %v70
    %73 = vmatprep.subr.mxu0 0.0
    %74 = vmatpush1.msra.mxu0 %v69
    %75 = vmatprep.subr.mxu0 0.0
    %76 = vmatpush1.msra.mxu0 %v68
    %77 = vmatprep.subr.mxu0 0.0
    %78 = vmatpush1.msra.mxu0 %v67
    %79 = vmatprep.subr.mxu0 0.0
    %80 = vmatpush1.msra.mxu0 %v66
    %81 = vmatprep.subr.mxu0 0.0
    %82 = vmatpush1.msra.mxu0 %v65
    %83 = vmatprep.subr.mxu0 0.0
    %84 = vmatpush1.msra.mxu0 %v64
    %85 = vmatprep.subr.mxu0 0.0
    %86 = vmatpush1.msra.mxu0 %v63
    %87 = vmatprep.subr.mxu0 0.0
    %88 = vmatpush1.msra.mxu0 %v62
    %89 = vmatprep.subr.mxu0 0.0
    %90 = vmatpush1.msra.mxu0 %v61
    %91 = vmatprep.subr.mxu0 0.0
    %92 = vmatpush1.msra.mxu0 %v60
    %93 = vmatprep.subr.mxu0 0.0
    %94 = vmatpush1.msra.mxu0 %v59
    %95 = vmatprep.subr.mxu0 0.0
    %96 = vmatpush1.msra.mxu0 %v58
    %97 = vmatprep.subr.mxu0 0.0
    %98 = vmatpush1.msra.mxu0 %v57
    %99 = vmatprep.subr.mxu0 0.0
    %100 = vmatpush1.msra.mxu0 %v56
    %101 = vmatprep.subr.mxu0 0.0
    %102 = vmatpush1.msra.mxu0 %v55
    %103 = vmatprep.subr.mxu0 0.0
    %104 = vmatpush2.msra.mxu0 0.0
    %105 = vmatprep.subr.mxu0 0.0
    %106 = vmatpush2.msra.mxu0 0.0
    %107 = vmatprep.subr.mxu0 0.0
    %108 = vmatpush2.msra.mxu0 0.0
    %109 = vmatprep.subr.mxu0 0.0
    %110 = vmatpush2.msra.mxu0 0.0
    %111 = vmatprep.subr.mxu0 0.0
    %112 = vmatpush2.msra.mxu0 0.0
    %113 = vmatprep.subr.mxu0 0.0
    %114 = vmatpush2.msra.mxu0 0.0
    %115 = vmatprep.subr.mxu0 0.0
    %116 = vmatpush2.msra.mxu0 0.0
    %117 = vmatprep.subr.mxu0 0.0
    %118 = vmatpush2.msra.mxu0 0.0
    %119 = vmatprep.subr.mxu0 0.0
    %120 = vmatpush2.msra.mxu0 0.0
    %121 = vmatprep.subr.mxu0 0.0
    %122 = vmatpush2.msra.mxu0 0.0
    %123 = vmatprep.subr.mxu0 0.0
    %124 = vmatpush2.msra.mxu0 0.0
    %125 = vmatprep.subr.mxu0 0.0
    %126 = vmatpush2.msra.mxu0 0.0
    %127 = vmatprep.subr.mxu0 0.0
    %128 = vmatpush2.msra.mxu0 0.0
    %129 = vmatprep.subr.mxu0 0.0
    %130 = vmatpush2.msra.mxu0 0.0
    %131 = vmatprep.subr.mxu0 0.0
    %132 = vmatpush2.msra.mxu0 0.0
    %133 = vmatprep.subr.mxu0 0.0
    %134 = vmatpush2.msra.mxu0 0.0
    %135 = vmatprep.mubr.f32.mxu0 0.0
    %136 = vmatmul.mubr.f32.gmra.mxu0 %v54
    %v137 = vpop.f32.mrf.mxu0
    %v138 = vadd.f32 0.0, %v137
    %v139 = vpop.f32.mrf.mxu0
    %140 = vdwg.mxu0
    %141 = vmatprep.subr.mxu0 0.0
    %142 = vmatpush1.msra.mxu0 %v53
    %143 = vmatprep.subr.mxu0 0.0
    %144 = vmatpush1.msra.mxu0 %v52
    %145 = vmatprep.subr.mxu0 0.0
    %146 = vmatpush1.msra.mxu0 %v51
    %147 = vmatprep.subr.mxu0 0.0
    %148 = vmatpush1.msra.mxu0 %v50
    %149 = vmatprep.subr.mxu0 0.0
    %150 = vmatpush1.msra.mxu0 %v49
    %151 = vmatprep.subr.mxu0 0.0
    %152 = vmatpush1.msra.mxu0 %v48
    %153 = vmatprep.subr.mxu0 0.0
    %154 = vmatpush1.msra.mxu0 %v47
    %155 = vmatprep.subr.mxu0 0.0
    %156 = vmatpush1.msra.mxu0 %v46
    %157 = vmatprep.subr.mxu0 0.0
    %158 = vmatpush1.msra.mxu0 %v45
    %159 = vmatprep.subr.mxu0 0.0
    %160 = vmatpush1.msra.mxu0 %v44
    %161 = vmatprep.subr.mxu0 0.0
    %162 = vmatpush1.msra.mxu0 %v43
    %163 = vmatprep.subr.mxu0 0.0
    %164 = vmatpush1.msra.mxu0 %v42
    %165 = vmatprep.subr.mxu0 0.0
    %166 = vmatpush1.msra.mxu0 %v41
    %167 = vmatprep.subr.mxu0 0.0
    %168 = vmatpush1.msra.mxu0 %v40
    %169 = vmatprep.subr.mxu0 0.0
    %170 = vmatpush1.msra.mxu0 %v39
    %171 = vmatprep.subr.mxu0 0.0
    %172 = vmatpush1.msra.mxu0 %v38
    %173 = vmatprep.subr.mxu0 0.0
    %174 = vmatpush2.msra.mxu0 0.0
    %175 = vmatprep.subr.mxu0 0.0
    %176 = vmatpush2.msra.mxu0 0.0
    %177 = vmatprep.subr.mxu0 0.0
    %178 = vmatpush2.msra.mxu0 0.0
    %179 = vmatprep.subr.mxu0 0.0
    %180 = vmatpush2.msra.mxu0 0.0
    %181 = vmatprep.subr.mxu0 0.0
    %182 = vmatpush2.msra.mxu0 0.0
    %183 = vmatprep.subr.mxu0 0.0
    %184 = vmatpush2.msra.mxu0 0.0
    %185 = vmatprep.subr.mxu0 0.0
    %186 = vmatpush2.msra.mxu0 0.0
    %187 = vmatprep.subr.mxu0 0.0
    %188 = vmatpush2.msra.mxu0 0.0
    %189 = vmatprep.subr.mxu0 0.0
    %190 = vmatpush2.msra.mxu0 0.0
    %191 = vmatprep.subr.mxu0 0.0
    %192 = vmatpush2.msra.mxu0 0.0
    %193 = vmatprep.subr.mxu0 0.0
    %194 = vmatpush2.msra.mxu0 0.0
    %195 = vmatprep.subr.mxu0 0.0
    %196 = vmatpush2.msra.mxu0 0.0
    %197 = vmatprep.subr.mxu0 0.0
    %198 = vmatpush2.msra.mxu0 0.0
    %199 = vmatprep.subr.mxu0 0.0
    %200 = vmatpush2.msra.mxu0 0.0
    %201 = vmatprep.subr.mxu0 0.0
    %202 = vmatpush2.msra.mxu0 0.0
    %203 = vmatprep.subr.mxu0 0.0
    %204 = vmatpush2.msra.mxu0 0.0
    %205 = vmatprep.mubr.f32.mxu0 0.0
    %206 = vmatmul.mubr.f32.gmra.mxu0 %v37
    %v207 = vpop.f32.mrf.mxu0
    %v208 = vadd.f32 %v138, %v207
    %v209 = vpop.f32.mrf.mxu0
    %210 = vdwg.mxu0
    %v211 = vld [vmem:[%s3] sm:$0x1]
    %s212 = sld [smem:[#allocation2]]
    %v213 = vstv %s212
    %v214 = vmul.f32 %v211, %v213
    %v215 = vadd.f32 %v208, %v214
    %s216 = sld [smem:[#allocation2 + $0x1]]
    %v217 = vstv %s216
    %v218 = vadd.f32 %v215, %v217
    %v219 = vxor.u32 %v218, 2147483648
    %v220 = vmul.f32 %v219, 1.442695
    %v221 = vpow.pop %v220
    %v222 = vadd.f32 %v221, 1.0
    %v223 = vrcp.pop %v222
    %v224 = vmul.f32 1.0, %v223
    %vm225 = vcmask 57344
    %226 = vst.msk [vmem:[#allocation5] sm:$0x1] %vm225, %v224
    // Predicated region
    $region30: #{tpu_custom_call.1} parent=1 // pred_check
      _
    $region31: #{tpu_custom_call.1} parent=1 // pred_check_branch
      %228 = sbr.rel (0) target = $region33
    $region32: #{tpu_custom_call.1} parent=1 // pred_region
      %s230 = ssub.s32 16, 16
      %231 = vsyncadd [#allocation3], %s230
      %s233 = sshll.u32 [#allocation5], 4
      %s234 = int_to_ptr.vmem [resolvable:$true] %s233
      %236 = dma.vmem_to_hbm [thread:$0]  %s234, 16, %s6, [#allocation3]
    $region33: #{tpu_custom_call.1} parent=1 // pred_fallthru
      _
    // Predicated region
    $region34: #{tpu_custom_call.1} parent=1 // pred_check
      _
    $region35: #{tpu_custom_call.1} parent=1 // pred_check_branch
      %238 = sbr.rel (0) target = $region37
    $region36: #{tpu_custom_call.1} parent=1 // pred_region
      %239 = dma.done [#allocation3], 16
    $region37: #{tpu_custom_call.1} parent=1 // pred_fallthru
      _
    %240 = vsyncpa [#allocation3], 1
    %241 = vsyncpa [#allocation4], 1

</llo_original>
